<compile_context>
chip_gen: v7x
topology: tpu7x:2x2x1
jax: 0.10.0
libtpu: 0.0.40
codegen_flags: <defaults>
</compile_context>

<pallas_src>
import math
import functools

import jax
import jax.numpy as jnp
from jax.experimental import pallas as pl
from jax.experimental.pallas import tpu as pltpu


# ---------------------------------------------------------------------------
# Parameter setup (equivalent of PositionalEncoding.__init__)
# ---------------------------------------------------------------------------
def make_pos_enc(model_dim: int, max_len: int = 50000) -> jnp.ndarray:
    """Builds the (max_len, model_dim) sinusoidal table, identical to PyTorch."""
    position = jnp.arange(0, max_len, dtype=jnp.float32)[:, None]          # (L, 1)
    div_term = jnp.exp(
        jnp.arange(0, model_dim, 2, dtype=jnp.float32)
        * (-math.log(10000.0) / model_dim)
    )                                                                       # (D/2,)
    angles = position * div_term                                            # (L, D/2)
    pe = jnp.zeros((max_len, model_dim), dtype=jnp.float32)
    pe = pe.at[:, 0::2].set(jnp.sin(angles))
    pe = pe.at[:, 1::2].set(jnp.cos(angles))
    return pe


# ---------------------------------------------------------------------------
# Kernels
# ---------------------------------------------------------------------------
def _pe_add_kernel(x_ref, pe_ref, o_ref):
    # x_ref: (B, TC)  pe_ref: (1, TC) broadcast over the batch rows
    o_ref[...] = (x_ref[...] + pe_ref[...]).astype(o_ref.dtype)


def _pe_add_dropout_kernel(x_ref, pe_ref, bits_ref, o_ref, *,
                           threshold: int, scale: float):
    # bits_ref holds uniform random int32; keep element iff bits >= threshold,
    # which happens with probability (1 - p).  Kept values scaled by 1/(1-p).
    y = x_ref[...] + pe_ref[...]
    keep = bits_ref[...] >= jnp.int32(threshold)
    o_ref[...] = jnp.where(keep, y * jnp.float32(scale), 0.0).astype(o_ref.dtype)


# ---------------------------------------------------------------------------
# Tiling helper
# ---------------------------------------------------------------------------
def _pick_col_tile(n_rows: int, total_cols: int,
                   bytes_per_elem: int = 4,
                   target_block_bytes: int = 1 << 20) -> int:
    """Largest lane-friendly column tile with ~target_block_bytes of x per block."""
    if n_rows * total_cols * bytes_per_elem <= target_block_bytes:
        return total_cols                                   # whole slab in one block
    tc = max(128, target_block_bytes // (n_rows * bytes_per_elem))
    tc = min(tc, total_cols)
    if tc < total_cols:
        tc = max(128, (tc // 128) * 128)                    # multiple of 128 lanes
    return int(tc)


# ---------------------------------------------------------------------------
# Forward pass (equivalent of PositionalEncoding.forward)
# ---------------------------------------------------------------------------
def positional_encoding_forward(x: jnp.ndarray,
                                pos_enc: jnp.ndarray,
                                dropout_key: jax.Array,
                                p_dropout: float = 0.1,
                                training: bool = True) -> jnp.ndarray:
    """x: (B, S, D) float32.  pos_enc: (max_len, D) table.  Returns (B, S, D)."""
    B, S, D = x.shape
    total = S * D

    # Lane-dense 2-D layout: rows = batch, cols = flattened (seq, dim).
    x2 = x.reshape(B, total)
    pe2 = pos_enc[:S, :].reshape(1, total)

    tc = _pick_col_tile(B, total)
    grid = (pl.cdiv(total, tc),)

    x_spec = pl.BlockSpec((B, tc), lambda c: (0, c))
    pe_spec = pl.BlockSpec((1, tc), lambda c: (0, c))
    out_spec = pl.BlockSpec((B, tc), lambda c: (0, c))

    cparams = pltpu.CompilerParams(
        dimension_semantics=("parallel",),        # no carried state -> 2 TCs on v7x
        vmem_limit_bytes=32 * 1024 * 1024,
    )

    apply_dropout = training and p_dropout > 0.0
    if apply_dropout:
        bits_u32 = jax.random.bits(dropout_key, (B, total), dtype=jnp.uint32)
        bits_i32 = jax.lax.bitcast_convert_type(bits_u32, jnp.int32)
        # Signed-domain threshold: P(int32_uniform >= t) == 1 - p.
        threshold = int(round(p_dropout * (2 ** 32))) - 2 ** 31
        threshold = max(-(2 ** 31), min(2 ** 31 - 1, threshold))
        scale = 1.0 / (1.0 - p_dropout)

        kernel = functools.partial(_pe_add_dropout_kernel,
                                   threshold=threshold, scale=scale)
        out2 = pl.pallas_call(
            kernel,
            out_shape=jax.ShapeDtypeStruct((B, total), x.dtype),
            grid=grid,
            in_specs=[x_spec, pe_spec,
                      pl.BlockSpec((B, tc), lambda c: (0, c))],   # bits
            out_specs=out_spec,
            compiler_params=cparams,
        )(x2, pe2, bits_i32)
    else:
        out2 = pl.pallas_call(
            _pe_add_kernel,
            out_shape=jax.ShapeDtypeStruct((B, total), x.dtype),
            grid=grid,
            in_specs=[x_spec, pe_spec],
            out_specs=out_spec,
            compiler_params=cparams,
        )(x2, pe2)

    return out2.reshape(B, S, D)


# ---------------------------------------------------------------------------
# Demo
# ---------------------------------------------------------------------------
if __name__ == "__main__":
    key = jax.random.PRNGKey(0)
    k_x, k_drop = jax.random.split(key)

    batch, seq, model_dim = 2, 8, 32
    max_len = 50000
    p_dropout = 0.1

    x = jax.random.normal(k_x, (batch, seq, model_dim), dtype=jnp.float32)
    pe_table = make_pos_enc(model_dim, max_len)

    # Training-mode forward (dropout active, as nn.Dropout in train mode)
    out = positional_encoding_forward(x, pe_table, k_drop,
                                      p_dropout=p_dropout, training=True)
    jax.block_until_ready(out)

    # Eval-mode: dropout disabled -> output must equal x + pe exactly
    out_eval = positional_encoding_forward(x, pe_table, k_drop,
                                           p_dropout=p_dropout, training=False)
    jax.block_until_ready(out_eval)

    ref = x + pe_table[:seq, :][None, :, :]
    assert jnp.allclose(out_eval, ref, atol=1e-6), "eval-mode mismatch"
    assert out.shape == x.shape and out.dtype == x.dtype

    # Training-mode sanity: every surviving element equals ref * 1/(1-p).
    scale = 1.0 / (1.0 - p_dropout)
    ok = jnp.where(out == 0.0, True,
                   jnp.isclose(out, ref * scale, rtol=1e-5, atol=1e-5))
    assert bool(jnp.all(ok)), "training-mode dropout values mismatch"

    print("KERNEL_OK")
</pallas_src>

<mosaic_0001>
module attributes {stable_mosaic.version = 11 : i64} {
  func.func @_pe_add_dropout_kernel(%arg0: i32, %arg1: memref<2x256xf32, #tpu.memory_space<vmem>>, %arg2: memref<1x256xf32, #tpu.memory_space<vmem>>, %arg3: memref<2x256xi32, #tpu.memory_space<vmem>>, %arg4: memref<2x256xf32, #tpu.memory_space<vmem>>) attributes {dimension_semantics = [#tpu.dimension_semantics<parallel>], iteration_bounds = array<i64: 1>, scalar_prefetch = 0 : i64, scratch_operands = 0 : i64, tpu.core_type = #tpu.core_type<tc>, window_params = [{transform_indices = @transform_0, window_bounds = array<i64: 2, 256>}, {transform_indices = @transform_1, window_bounds = array<i64: 1, 256>}, {transform_indices = @transform_2, window_bounds = array<i64: 2, 256>}, {transform_indices = @transform_3, window_bounds = array<i64: 2, 256>}]} {
    %c0 = arith.constant 0 : index
    %c0_0 = arith.constant 0 : index
    %0 = vector.load %arg1[%c0, %c0_0] : memref<2x256xf32, #tpu.memory_space<vmem>>, vector<2x256xf32>
    %c0_1 = arith.constant 0 : index
    %c0_2 = arith.constant 0 : index
    %1 = vector.load %arg2[%c0_1, %c0_2] : memref<1x256xf32, #tpu.memory_space<vmem>>, vector<1x256xf32>
    %2 = vector.broadcast %1 : vector<1x256xf32> to vector<2x256xf32>
    %3 = arith.addf %0, %2 : vector<2x256xf32>
    %c0_3 = arith.constant 0 : index
    %c0_4 = arith.constant 0 : index
    %4 = vector.load %arg3[%c0_3, %c0_4] : memref<2x256xi32, #tpu.memory_space<vmem>>, vector<2x256xi32>
    %c-1717986918_i32 = arith.constant -1717986918 : i32
    %5 = vector.broadcast %c-1717986918_i32 : i32 to vector<2x256xi32>
    %6 = arith.cmpi sge, %4, %5 : vector<2x256xi32>
    %cst = arith.constant 1.11111116 : f32
    %7 = vector.broadcast %cst : f32 to vector<2x256xf32>
    %8 = arith.mulf %3, %7 : vector<2x256xf32>
    %cst_5 = arith.constant 0.000000e+00 : f32
    %9 = vector.broadcast %cst_5 : f32 to vector<2x256xf32>
    %10 = arith.select %6, %8, %9 : vector<2x256xi1>, vector<2x256xf32>
    %c0_6 = arith.constant 0 : index
    %c0_7 = arith.constant 0 : index
    %11 = vector.load %arg4[%c0_6, %c0_7] : memref<2x256xf32, #tpu.memory_space<vmem>>, vector<2x256xf32>
    tpu.vector_store %arg4[%c0_6, %c0_7], %10 {strides = array<i32>} : memref<2x256xf32, #tpu.memory_space<vmem>>, vector<2x256xf32>,
    return
  }
  func.func @transform_0(%arg0: i32) -> (i32, i32) {
    %c0_i32 = arith.constant 0 : i32
    %c0_i32_0 = arith.constant 0 : i32
    return %c0_i32, %arg0 : i32, i32
  }
  func.func @transform_1(%arg0: i32) -> (i32, i32) {
    %c0_i32 = arith.constant 0 : i32
    %c0_i32_0 = arith.constant 0 : i32
    return %c0_i32, %arg0 : i32, i32
  }
  func.func @transform_2(%arg0: i32) -> (i32, i32) {
    %c0_i32 = arith.constant 0 : i32
    %c0_i32_0 = arith.constant 0 : i32
    return %c0_i32, %arg0 : i32, i32
  }
  func.func @transform_3(%arg0: i32) -> (i32, i32) {
    %c0_i32 = arith.constant 0 : i32
    %c0_i32_0 = arith.constant 0 : i32
    return %c0_i32, %arg0 : i32, i32
  }
}

</mosaic_0001>

<llo_original>
// kernel: tpu_custom_call.1
$region0: #{tpu_custom_call.1}
  #allocation0 [shape = 'u32[]', space=smem, size = 0x4, offset = 0x4, fixed_abs, tag = 'smem constant byte address 0x4 - core index']
  #allocation1 [shape = 'u32[144,128]{1,0:T(1,128)}', space=vmem, size = 0x12000, scoped, tag = 'internal scratch']
  %s0 = inlined_call_operand.hbm [shape: f32[2,256], index: 0, kind: input, shape index: {}]
  %s1 = inlined_call_operand.vmem [shape: f32[1,256], index: 1, kind: input, shape index: {}]
  %s2 = inlined_call_operand.vmem [shape: s32[2,256], index: 2, kind: input, shape index: {}]
  %s3 = inlined_call_operand.hbm [shape: f32[2,256], index: 3, kind: output, shape index: {}]
  %s4 = sld [smem:[#allocation0]]
  $region26: #{tpu_custom_call.1} parent=0
    _
  %s6 = ssub.s32 1, %s4
  %s7 = scalar_select 0, %s6, %s4
  $region1: #{tpu_custom_call.1} parent=0
    #allocation2 [shape = 'u8[2048]{0}', space=vmem, size = 0x800, scoped, tag = 'input window, operand 0, single buffered']
    #allocation3 [shape = 's32[1]{0}', space=sflag, size = 0x4, scoped, tag = 'scoped memory for tpu_custom_call.1']
    #allocation4 [shape = 's32[1]{0}', space=sflag, size = 0x4, scoped, tag = 'scoped memory for tpu_custom_call.1']
    #allocation5 [shape = 'u8[2048]{0}', space=vmem, size = 0x800, scoped, tag = 'output window, operand 0, single buffered']
    %8 = vsyncpa [#allocation3], 0
    %9 = vsyncpa [#allocation4], 0
    // Predicated region
    $region2: #{tpu_custom_call.1} parent=1 // pred_check
      _
    $region3: #{tpu_custom_call.1} parent=1 // pred_check_branch
      %11 = sbr.rel (0) target = $region5
    $region4: #{tpu_custom_call.1} parent=1 // pred_region
      %s13 = ssub.s32 64, 64
      %14 = vsyncadd [#allocation3], %s13
      %s16 = sshll.u32 [#allocation2], 4
      %s17 = int_to_ptr.vmem [resolvable:$true] %s16
      %19 = dma.hbm_to_vmem [thread:$0]  %s0, 64, %s17, [#allocation3]
    $region5: #{tpu_custom_call.1} parent=1 // pred_fallthru
      _
    // Predicated region
    $region6: #{tpu_custom_call.1} parent=1 // pred_check
      _
    $region7: #{tpu_custom_call.1} parent=1 // pred_check_branch
      %21 = sbr.rel (0) target = $region9
    $region8: #{tpu_custom_call.1} parent=1 // pred_region
      _
    $region9: #{tpu_custom_call.1} parent=1 // pred_fallthru
      _
    // Predicated region
    $region10: #{tpu_custom_call.1} parent=1 // pred_check
      _
    $region11: #{tpu_custom_call.1} parent=1 // pred_check_branch
      %23 = sbr.rel (0) target = $region13
    $region12: #{tpu_custom_call.1} parent=1 // pred_region
      _
    $region13: #{tpu_custom_call.1} parent=1 // pred_fallthru
      _
    // Predicated region
    $region14: #{tpu_custom_call.1} parent=1 // pred_check
      _
    $region15: #{tpu_custom_call.1} parent=1 // pred_check_branch
      %25 = sbr.rel (0) target = $region17
    $region16: #{tpu_custom_call.1} parent=1 // pred_region
      %26 = dma.done [#allocation3], 64
    $region17: #{tpu_custom_call.1} parent=1 // pred_fallthru
      _
    %v27 = vld [vmem:[#allocation2] sm:$0xf]
    %v28 = vld [vmem:[%s1] sm:$0x3]
    %v30 = vlaneseq
    %v31 = vshrl.u32 %v30, 7
    %v32 = vsub.s32 0, %v31
    %v33 = vrot.slane %v28, %v32
    %v34 = vlaneseq
    %v35 = vshrl.u32 %v34, 7
    %v36 = vsub.s32 1, %v35
    %v37 = vrot.slane %v28, %v36
    %v38 = vcombine.low %v33, %v37
    %v40 = vunpack.c.l.s4 1983009808
    %v41 = vunpack.c.0.s8 %v40
    %v42 = vlaneseq
    %v43 = vshrl.u32 %v42, 7
    %v44 = vsub.s32 %v41, %v43
    %v45 = vrot.slane %v38, %v44
    %v47 = vadd.f32 %v27, %v45
    %v48 = vld [vmem:[%s2] sm:$0xf]
    %vm49 = vcmp.ge.s32.totalorder %v48, 2576980378
    %v50 = vmul.f32 %v47, 1.1111112
    %v51 = vsel %vm49, %v50, 0.0
    %52 = vst [vmem:[#allocation5] sm:$0xf] %v51
    // Predicated region
    $region18: #{tpu_custom_call.1} parent=1 // pred_check
      _
    $region19: #{tpu_custom_call.1} parent=1 // pred_check_branch
      %54 = sbr.rel (0) target = $region21
    $region20: #{tpu_custom_call.1} parent=1 // pred_region
      %s56 = ssub.s32 64, 64
      %57 = vsyncadd [#allocation4], %s56
      %s59 = sshll.u32 [#allocation5], 4
      %s60 = int_to_ptr.vmem [resolvable:$true] %s59
      %62 = dma.vmem_to_hbm [thread:$0]  %s60, 64, %s3, [#allocation4]
    $region21: #{tpu_custom_call.1} parent=1 // pred_fallthru
      _
    // Predicated region
    $region22: #{tpu_custom_call.1} parent=1 // pred_check
      _
    $region23: #{tpu_custom_call.1} parent=1 // pred_check_branch
      %64 = sbr.rel (0) target = $region25
    $region24: #{tpu_custom_call.1} parent=1 // pred_region
      %65 = dma.done [#allocation4], 64
    $region25: #{tpu_custom_call.1} parent=1 // pred_fallthru
      _
    %66 = vsyncpa [#allocation3], 1
    %67 = vsyncpa [#allocation4], 1

</llo_original>
